<compile_context>
chip_gen: v7x
topology: tpu7x:2x2x1
jax: 0.10.0
libtpu: 0.0.40
codegen_flags: <defaults>
</compile_context>

<pallas_src>
import functools

import jax
import jax.numpy as jnp
from jax.experimental import pallas as pl
from jax.experimental.pallas import tpu as pltpu


def _contrastive_pair_kernel(bi_ref, bj_ref, emb_i_ref, emb_j_ref,
                             sqn_i_ref, sqn_j_ref, lab_i_ref, lab_j_ref,
                             *rest, margin: float, masked: bool):
    if masked:
        valid_i_ref, valid_j_ref, out_ref = rest
    else:
        (out_ref,) = rest

    p = pl.program_id(0)

    emb_i = emb_i_ref[...]                      # (tile, D) — fed to MXU as-is
    emb_j = emb_j_ref[...]                      # (tile, D)
    tile, feat = emb_i.shape

    # Gram block on the MXU; contracting the LAST dim of both operands avoids
    # any in-kernel transpose / relayout. Fold the -2 into whichever operand
    # is cheaper (static choice).
    if feat <= tile:
        gram = jax.lax.dot_general(
            emb_i * jnp.asarray(-2.0, dtype=emb_i.dtype), emb_j,
            dimension_numbers=(((1,), (1,)), ((), ())),
            preferred_element_type=jnp.float32)          # (tile, tile) f32
        d2 = sqn_i_ref[...] + sqn_j_ref[...] + gram
    else:
        gram = jax.lax.dot_general(
            emb_i, emb_j,
            dimension_numbers=(((1,), (1,)), ((), ())),
            preferred_element_type=jnp.float32)
        d2 = sqn_i_ref[...] + sqn_j_ref[...] - 2.0 * gram

    d2 = jnp.maximum(d2, 0.0)
    dist = jnp.sqrt(d2) + 1e-8                  # torch.cdist(..., p=2) + 1e-8

    same = lab_i_ref[...] == lab_j_ref[...]     # (tile, tile) bool
    hinge = jnp.maximum(margin - dist, 0.0)
    sel = jnp.where(same, dist, hinge)          # select-then-square
    term = sel * sel

    if masked:
        term = term * valid_j_ref[...]          # zero padded columns

    # Hierarchical reduction: lane-reduce (XLU) then sublane-reduce to scalar.
    row_sums = jnp.sum(term, axis=1, keepdims=True)      # (tile, 1) f32
    if masked:
        row_sums = row_sums * valid_i_ref[...]            # zero padded rows

    # Off-diagonal block pairs stand in for their mirrored twin as well.
    weight = jnp.where(bi_ref[p] == bj_ref[p], 1.0, 2.0).astype(jnp.float32)
    partial = jnp.sum(row_sums) * weight

    # Lane-dense, unmasked full-vreg store of the scalar partial.
    out_ref[...] = jnp.full((1, 8, 128), partial, dtype=jnp.float32)


def _round_up(x: int, m: int) -> int:
    return ((x + m - 1) // m) * m


@functools.partial(jax.jit, static_argnames=("margin", "tile_cap"))
def contrastive_loss(embeddings: jax.Array, labels: jax.Array,
                     margin: float = 0.2, tile_cap: int = 256) -> jax.Array:
    """embeddings: [N, D] float, labels: [N] int -> scalar float32 loss."""
    assert tile_cap % 128 == 0 and tile_cap >= 128, \
        "tile_cap must be a multiple of 128"
    n, d = embeddings.shape
    emb_bytes = embeddings.dtype.itemsize

    if n <= 128:
        # Single block; block dims equal the full array so any size is legal.
        tile = _round_up(max(n, 1), 8)
    else:
        # 128-aligned (lane-dense) tiles, minimal padding, and >= 2 row blocks
        # so the 'parallel' pair axis spans both v7x TensorCores.
        blocks128 = -(-n // 128)
        chunks = min(tile_cap // 128, max(1, blocks128 // 2))
        tile = 128 * chunks
        # Keep double-buffered (tile, D) embedding blocks + (tile, tile)
        # intermediates inside a conservative VMEM budget (v7x: 64 MiB phys).
        budget = 24 * 1024 * 1024
        while tile > 128 and (4 * tile * d * emb_bytes
                              + 6 * tile * tile * 4) > budget:
            tile -= 128

    nb = -(-n // tile)
    n_pad = nb * tile
    masked = n_pad != n

    emb = embeddings
    lab = labels.astype(jnp.int32)
    if masked:
        emb = jnp.pad(emb, ((0, n_pad - n), (0, 0)))
        lab = jnp.pad(lab, (0, n_pad - n))

    # Precompute squared norms / labels in both layouts in the (fused) wrapper
    # so the kernel never transposes a skinny vector.
    sqn = jnp.sum(emb.astype(jnp.float32) ** 2, axis=-1)
    sqn_col = sqn.reshape(n_pad, 1)
    sqn_row = sqn.reshape(1, n_pad)
    lab_col = lab.reshape(n_pad, 1)
    lab_row = lab.reshape(1, n_pad)

    # Upper-triangular block-pair index set, scalar-prefetched into SMEM and
    # consumed by every index_map (data-dependent tiling).
    pairs = [(bi, bj) for bi in range(nb) for bj in range(bi, nb)]
    num_pairs = len(pairs)
    bi_arr = jnp.asarray([pr[0] for pr in pairs], dtype=jnp.int32)
    bj_arr = jnp.asarray([pr[1] for pr in pairs], dtype=jnp.int32)

    in_specs = [
        pl.BlockSpec((tile, d), lambda p, bi, bj: (bi[p], 0)),   # emb_i block
        pl.BlockSpec((tile, d), lambda p, bi, bj: (bj[p], 0)),   # emb_j block
        pl.BlockSpec((tile, 1), lambda p, bi, bj: (bi[p], 0)),   # ||x_i||^2
        pl.BlockSpec((1, tile), lambda p, bi, bj: (0, bj[p])),   # ||x_j||^2
        pl.BlockSpec((tile, 1), lambda p, bi, bj: (bi[p], 0)),   # labels_i
        pl.BlockSpec((1, tile), lambda p, bi, bj: (0, bj[p])),   # labels_j
    ]
    operands = [emb, emb, sqn_col, sqn_row, lab_col, lab_row]
    if masked:
        valid = (jnp.arange(n_pad) < n).astype(jnp.float32)
        in_specs += [
            pl.BlockSpec((tile, 1), lambda p, bi, bj: (bi[p], 0)),  # valid_i
            pl.BlockSpec((1, tile), lambda p, bi, bj: (0, bj[p])),  # valid_j
        ]
        operands += [valid.reshape(n_pad, 1), valid.reshape(1, n_pad)]

    kernel = functools.partial(_contrastive_pair_kernel,
                               margin=float(margin), masked=masked)

    cost = pl.CostEstimate(
        flops=int(num_pairs * (2 * tile * tile * d + 10 * tile * tile)),
        transcendentals=int(num_pairs * tile * tile),
        bytes_accessed=int(num_pairs * 2 * tile * d * emb_bytes
                           + n_pad * (d * emb_bytes + 12)
                           + num_pairs * 8 * 128 * 4),
    )

    vmem_need = 4 * tile * d * emb_bytes + 6 * tile * tile * 4 + (1 << 20)
    vmem_limit = int(min(max(2 * vmem_need, 32 << 20), 48 << 20))

    partials = pl.pallas_call(
        kernel,
        out_shape=jax.ShapeDtypeStruct((num_pairs, 8, 128), jnp.float32),
        grid_spec=pltpu.PrefetchScalarGridSpec(
            num_scalar_prefetch=2,
            grid=(num_pairs,),
            in_specs=in_specs,
            out_specs=pl.BlockSpec((1, 8, 128), lambda p, bi, bj: (p, 0, 0)),
        ),
        compiler_params=pltpu.CompilerParams(
            dimension_semantics=("parallel",),
            vmem_limit_bytes=vmem_limit),
        cost_estimate=cost,
    )(bi_arr, bj_arr, *operands)

    return jnp.sum(partials[:, 0, 0]) / jnp.float32(n)


def _reference_loss(embeddings, labels, margin=0.2):
    diff = embeddings[:, None, :] - embeddings[None, :, :]
    distances = jnp.sqrt(jnp.sum(diff * diff, axis=-1)) + 1e-8
    label_matrix = (labels[None, :] == labels[:, None]).astype(jnp.float32)
    pos_loss = label_matrix * distances ** 2
    neg_loss = (1.0 - label_matrix) * jnp.maximum(margin - distances, 0.0) ** 2
    return jnp.sum(pos_loss + neg_loss) / embeddings.shape[0]


if __name__ == "__main__":
    key = jax.random.PRNGKey(0)
    k_emb, k_lab = jax.random.split(key)

    # Small shape implied by the module: batch of 8 embeddings, hidden dim 32.
    N, D = 8, 32
    embeddings = jax.random.normal(k_emb, (N, D), dtype=jnp.float32)
    labels = jax.random.randint(k_lab, (N,), 0, 3, dtype=jnp.int32)

    loss = contrastive_loss(embeddings, labels, margin=0.2)
    jax.block_until_ready(loss)
    ref = _reference_loss(embeddings, labels, margin=0.2)
    assert jnp.allclose(loss, ref, rtol=1e-5, atol=1e-5), (loss, ref)

    # Also exercise the multi-block upper-triangular pair grid + padding mask
    # path (N > 128, N not a multiple of the tile size).
    k2_emb, k2_lab = jax.random.split(jax.random.PRNGKey(1))
    N2, D2 = 300, 64
    emb2 = jax.random.normal(k2_emb, (N2, D2), dtype=jnp.float32)
    lab2 = jax.random.randint(k2_lab, (N2,), 0, 5, dtype=jnp.int32)
    loss2 = contrastive_loss(emb2, lab2, margin=0.2)
    jax.block_until_ready(loss2)
    ref2 = _reference_loss(emb2, lab2, margin=0.2)
    assert jnp.allclose(loss2, ref2, rtol=5e-4, atol=5e-4), (loss2, ref2)

    print("KERNEL_OK")
</pallas_src>

<mosaic_0001>
module attributes {stable_mosaic.version = 11 : i64} {
  func.func @_contrastive_pair_kernel(%arg0: i32, %arg1: memref<1xi32, #tpu.memory_space<smem>>, %arg2: memref<1xi32, #tpu.memory_space<smem>>, %arg3: memref<8x32xf32, #tpu.memory_space<vmem>>, %arg4: memref<8x32xf32, #tpu.memory_space<vmem>>, %arg5: memref<8x1xf32, #tpu.memory_space<vmem>>, %arg6: memref<1x8xf32, #tpu.memory_space<vmem>>, %arg7: memref<8x1xi32, #tpu.memory_space<vmem>>, %arg8: memref<1x8xi32, #tpu.memory_space<vmem>>, %arg9: memref<1x8x128xf32, #tpu.memory_space<vmem>>) attributes {dimension_semantics = [#tpu.dimension_semantics<parallel>], iteration_bounds = array<i64: 1>, scalar_prefetch = 2 : i64, scratch_operands = 0 : i64, tpu.core_type = #tpu.core_type<tc>, window_params = [{transform_indices = @transform_0, window_bounds = array<i64: 8, 32>}, {transform_indices = @transform_1, window_bounds = array<i64: 8, 32>}, {transform_indices = @transform_2, window_bounds = array<i64: 8, 1>}, {transform_indices = @transform_3, window_bounds = array<i64: 1, 8>}, {transform_indices = @transform_4, window_bounds = array<i64: 8, 1>}, {transform_indices = @transform_5, window_bounds = array<i64: 1, 8>}, {transform_indices = @transform_6, window_bounds = array<i64: 1, 8, 128>}]} {
    %c0 = arith.constant 0 : index
    %c0_0 = arith.constant 0 : index
    %0 = vector.load %arg3[%c0, %c0_0] : memref<8x32xf32, #tpu.memory_space<vmem>>, vector<8x32xf32>
    %c0_1 = arith.constant 0 : index
    %c0_2 = arith.constant 0 : index
    %1 = vector.load %arg4[%c0_1, %c0_2] : memref<8x32xf32, #tpu.memory_space<vmem>>, vector<8x32xf32>
    %cst = arith.constant dense<0.000000e+00> : vector<8x8xf32>
    %2 = tpu.matmul %0, %1, %cst {dimension_numbers = #tpu.dot_dimension_numbers<[1], [1], [0], [0], [0, 0, 1, 0], [], []>} : vector<8x32xf32>, vector<8x32xf32>, vector<8x8xf32> -> vector<8x8xf32>
    %c0_3 = arith.constant 0 : index
    %c0_4 = arith.constant 0 : index
    %3 = vector.load %arg5[%c0_3, %c0_4] : memref<8x1xf32, #tpu.memory_space<vmem>>, vector<8x1xf32>
    %c0_5 = arith.constant 0 : index
    %c0_6 = arith.constant 0 : index
    %4 = vector.load %arg6[%c0_5, %c0_6] : memref<1x8xf32, #tpu.memory_space<vmem>>, vector<1x8xf32>
    %5 = vector.broadcast %3 : vector<8x1xf32> to vector<8x8xf32>
    %6 = vector.broadcast %4 : vector<1x8xf32> to vector<8x8xf32>
    %7 = arith.addf %5, %6 : vector<8x8xf32>
    %cst_7 = arith.constant 2.000000e+00 : f32
    %8 = vector.broadcast %cst_7 : f32 to vector<8x8xf32>
    %9 = arith.mulf %8, %2 : vector<8x8xf32>
    %10 = arith.subf %7, %9 : vector<8x8xf32>
    %cst_8 = arith.constant 0.000000e+00 : f32
    %11 = vector.broadcast %cst_8 : f32 to vector<8x8xf32>
    %12 = arith.maximumf %10, %11 : vector<8x8xf32>
    %13 = math.sqrt %12 : vector<8x8xf32>
    %cst_9 = arith.constant 9.99999993E-9 : f32
    %14 = vector.broadcast %cst_9 : f32 to vector<8x8xf32>
    %15 = arith.addf %13, %14 : vector<8x8xf32>
    %c0_10 = arith.constant 0 : index
    %c0_11 = arith.constant 0 : index
    %16 = vector.load %arg7[%c0_10, %c0_11] : memref<8x1xi32, #tpu.memory_space<vmem>>, vector<8x1xi32>
    %c0_12 = arith.constant 0 : index
    %c0_13 = arith.constant 0 : index
    %17 = vector.load %arg8[%c0_12, %c0_13] : memref<1x8xi32, #tpu.memory_space<vmem>>, vector<1x8xi32>
    %18 = vector.broadcast %16 : vector<8x1xi32> to vector<8x8xi32>
    %19 = vector.broadcast %17 : vector<1x8xi32> to vector<8x8xi32>
    %20 = arith.cmpi eq, %18, %19 : vector<8x8xi32>
    %cst_14 = arith.constant 2.000000e-01 : f32
    %21 = vector.broadcast %cst_14 : f32 to vector<8x8xf32>
    %22 = arith.subf %21, %15 : vector<8x8xf32>
    %cst_15 = arith.constant 0.000000e+00 : f32
    %23 = vector.broadcast %cst_15 : f32 to vector<8x8xf32>
    %24 = arith.maximumf %22, %23 : vector<8x8xf32>
    %25 = arith.select %20, %15, %24 : vector<8x8xi1>, vector<8x8xf32>
    %26 = arith.mulf %25, %25 : vector<8x8xf32>
    %cst_16 = arith.constant dense<0.000000e+00> : vector<8xf32>
    %27 = vector.multi_reduction <add>, %26, %cst_16 [1] : vector<8x8xf32> to vector<8xf32>
    %28 = vector.shape_cast %27 : vector<8xf32> to vector<8x1xf32>
    %29 = arith.index_cast %arg0 : i32 to index
    %30 = memref.load %arg1[%29] : memref<1xi32, #tpu.memory_space<smem>>
    %31 = arith.index_cast %arg0 : i32 to index
    %32 = memref.load %arg2[%31] : memref<1xi32, #tpu.memory_space<smem>>
    %33 = arith.cmpi eq, %30, %32 : i32
    %cst_17 = arith.constant 1.000000e+00 : f32
    %cst_18 = arith.constant 2.000000e+00 : f32
    %34 = arith.select %33, %cst_17, %cst_18 : f32
    %35 = vector.shape_cast %28 : vector<8x1xf32> to vector<1x8x1xf32>
    %cst_19 = arith.constant dense<0.000000e+00> : vector<1xf32>
    %36 = vector.multi_reduction <add>, %35, %cst_19 [1, 2] : vector<1x8x1xf32> to vector<1xf32>
    %37 = vector.shape_cast %36 : vector<1xf32> to vector<1x1x1xf32>
    %38 = vector.extract %37[0, 0, 0] : f32 from vector<1x1x1xf32>
    %39 = arith.mulf %38, %34 : f32
    %40 = vector.broadcast %39 : f32 to vector<1x8x128xf32>
    %c0_20 = arith.constant 0 : index
    %c0_21 = arith.constant 0 : index
    %c0_22 = arith.constant 0 : index
    %41 = vector.load %arg9[%c0_20, %c0_21, %c0_22] : memref<1x8x128xf32, #tpu.memory_space<vmem>>, vector<1x8x128xf32>
    tpu.vector_store %arg9[%c0_20, %c0_21, %c0_22], %40 {strides = array<i32>} : memref<1x8x128xf32, #tpu.memory_space<vmem>>, vector<1x8x128xf32>,
    return
  }
  func.func @transform_0(%arg0: i32, %arg1: memref<1xi32, #tpu.memory_space<smem>>, %arg2: memref<1xi32, #tpu.memory_space<smem>>) -> (i32, i32) {
    %0 = arith.index_cast %arg0 : i32 to index
    %1 = memref.load %arg1[%0] : memref<1xi32, #tpu.memory_space<smem>>
    %c0_i32 = arith.constant 0 : i32
    %c0_i32_0 = arith.constant 0 : i32
    return %1, %c0_i32 : i32, i32
  }
  func.func @transform_1(%arg0: i32, %arg1: memref<1xi32, #tpu.memory_space<smem>>, %arg2: memref<1xi32, #tpu.memory_space<smem>>) -> (i32, i32) {
    %0 = arith.index_cast %arg0 : i32 to index
    %1 = memref.load %arg2[%0] : memref<1xi32, #tpu.memory_space<smem>>
    %c0_i32 = arith.constant 0 : i32
    %c0_i32_0 = arith.constant 0 : i32
    return %1, %c0_i32 : i32, i32
  }
  func.func @transform_2(%arg0: i32, %arg1: memref<1xi32, #tpu.memory_space<smem>>, %arg2: memref<1xi32, #tpu.memory_space<smem>>) -> (i32, i32) {
    %0 = arith.index_cast %arg0 : i32 to index
    %1 = memref.load %arg1[%0] : memref<1xi32, #tpu.memory_space<smem>>
    %c0_i32 = arith.constant 0 : i32
    %c0_i32_0 = arith.constant 0 : i32
    return %1, %c0_i32 : i32, i32
  }
  func.func @transform_3(%arg0: i32, %arg1: memref<1xi32, #tpu.memory_space<smem>>, %arg2: memref<1xi32, #tpu.memory_space<smem>>) -> (i32, i32) {
    %0 = arith.index_cast %arg0 : i32 to index
    %1 = memref.load %arg2[%0] : memref<1xi32, #tpu.memory_space<smem>>
    %c0_i32 = arith.constant 0 : i32
    %c0_i32_0 = arith.constant 0 : i32
    return %c0_i32, %1 : i32, i32
  }
  func.func @transform_4(%arg0: i32, %arg1: memref<1xi32, #tpu.memory_space<smem>>, %arg2: memref<1xi32, #tpu.memory_space<smem>>) -> (i32, i32) {
    %0 = arith.index_cast %arg0 : i32 to index
    %1 = memref.load %arg1[%0] : memref<1xi32, #tpu.memory_space<smem>>
    %c0_i32 = arith.constant 0 : i32
    %c0_i32_0 = arith.constant 0 : i32
    return %1, %c0_i32 : i32, i32
  }
  func.func @transform_5(%arg0: i32, %arg1: memref<1xi32, #tpu.memory_space<smem>>, %arg2: memref<1xi32, #tpu.memory_space<smem>>) -> (i32, i32) {
    %0 = arith.index_cast %arg0 : i32 to index
    %1 = memref.load %arg2[%0] : memref<1xi32, #tpu.memory_space<smem>>
    %c0_i32 = arith.constant 0 : i32
    %c0_i32_0 = arith.constant 0 : i32
    return %c0_i32, %1 : i32, i32
  }
  func.func @transform_6(%arg0: i32, %arg1: memref<1xi32, #tpu.memory_space<smem>>, %arg2: memref<1xi32, #tpu.memory_space<smem>>) -> (i32, i32, i32) {
    %c0_i32 = arith.constant 0 : i32
    %c0_i32_0 = arith.constant 0 : i32
    %c0_i32_1 = arith.constant 0 : i32
    return %arg0, %c0_i32, %c0_i32_0 : i32, i32, i32
  }
}

</mosaic_0001>

<llo_original>
// kernel: contrastive_loss.1
$region0: #{contrastive_loss.1}
  #allocation0 [shape = 'u32[]', space=smem, size = 0x4, offset = 0x4, fixed_abs, tag = 'smem constant byte address 0x4 - core index']
  #allocation1 [shape = 'u32[144,128]{1,0:T(1,128)}', space=vmem, size = 0x12000, scoped, tag = 'internal scratch']
  #allocation2 [shape = 's32[1]{0}', space=sflag, size = 0x4, scoped, tag = 'scoped memory for contrastive_loss.1']
  #allocation3 [shape = 's32[1]{0:T(128)S(6)}', space=smem, size = 0x200, scoped, tag = 'prefetched SMEM operand 0']
  #allocation4 [shape = 's32[1]{0:T(128)S(6)}', space=smem, size = 0x200, scoped, tag = 'prefetched SMEM operand 1']
  %s0 = inlined_call_operand.<no memory space> [shape: s32[1], index: 0, kind: input, shape index: {}, may-alias: {0,1}]
  %s1 = inlined_call_operand.<no memory space> [shape: s32[1], index: 1, kind: input, shape index: {}, may-alias: {0,1}]
  %s2 = inlined_call_operand.vmem [shape: f32[8,32], index: 2, kind: input, shape index: {}, may-alias: {2,3}]
  %s3 = inlined_call_operand.vmem [shape: f32[8,32], index: 3, kind: input, shape index: {}, may-alias: {2,3}]
  %s4 = inlined_call_operand.vmem [shape: f32[8,1], index: 4, kind: input, shape index: {}]
  %s5 = inlined_call_operand.vmem [shape: f32[1,8], index: 5, kind: input, shape index: {}]
  %s6 = inlined_call_operand.vmem [shape: s32[8,1], index: 6, kind: input, shape index: {}]
  %s7 = inlined_call_operand.vmem [shape: s32[1,8], index: 7, kind: input, shape index: {}]
  %s8 = inlined_call_operand.vmem [shape: f32[1,8,128], index: 8, kind: output, shape index: {}]
  %s9 = sld [smem:[#allocation0]]
  $region34: #{contrastive_loss.1} parent=0
    _
  %s11 = ssub.s32 1, %s9
  %s12 = scalar_select 0, %s11, %s9
  %13 = sst [smem:[#allocation3]] %s0
  %14 = sst [smem:[#allocation4]] %s1
  // Predicated region
  $region2: #{contrastive_loss.1} parent=0 // pred_check
    _
  $region3: #{contrastive_loss.1} parent=0 // pred_check_branch
    %16 = sbr.rel (0) target = $region5
  $region4: #{contrastive_loss.1} parent=0 // pred_region
    %s17 = sld [smem:[#allocation3]]
    %p18 = scmp.lt.s32.totalorder %s17, 0
    %s19 = scalar_select %p18, %s17, 0
    %s20 = smul.addr %s19, 8
    %s21 = scalar_lea.vmem %s2, %s20
    %s22 = sld [smem:[#allocation3]]
  $region5: #{contrastive_loss.1} parent=0 // pred_fallthru
    _
  // Predicated region
  $region6: #{contrastive_loss.1} parent=0 // pred_check
    _
  $region7: #{contrastive_loss.1} parent=0 // pred_check_branch
    %24 = sbr.rel (0) target = $region9
  $region8: #{contrastive_loss.1} parent=0 // pred_region
    %s25 = sld [smem:[#allocation4]]
    %p26 = scmp.lt.s32.totalorder %s25, 0
    %s27 = scalar_select %p26, %s25, 0
    %s28 = smul.addr %s27, 8
    %s29 = scalar_lea.vmem %s3, %s28
    %s30 = sld [smem:[#allocation4]]
  $region9: #{contrastive_loss.1} parent=0 // pred_fallthru
    _
  // Predicated region
  $region10: #{contrastive_loss.1} parent=0 // pred_check
    _
  $region11: #{contrastive_loss.1} parent=0 // pred_check_branch
    %32 = sbr.rel (0) target = $region13
  $region12: #{contrastive_loss.1} parent=0 // pred_region
    %s33 = sld [smem:[#allocation3]]
    %p34 = scmp.lt.s32.totalorder %s33, 0
    %s35 = scalar_select %p34, %s33, 0
    %s36 = smul.addr %s35, 8
    %s37 = scalar_lea.vmem %s4, %s36
    %s38 = sld [smem:[#allocation3]]
  $region13: #{contrastive_loss.1} parent=0 // pred_fallthru
    _
  // Predicated region
  $region14: #{contrastive_loss.1} parent=0 // pred_check
    _
  $region15: #{contrastive_loss.1} parent=0 // pred_check_branch
    %40 = sbr.rel (0) target = $region17
  $region16: #{contrastive_loss.1} parent=0 // pred_region
    %s41 = sld [smem:[#allocation4]]
    %p42 = scmp.lt.s32.totalorder %s41, 0
    %s43 = scalar_select %p42, %s41, 0
    %s44 = scalar_lea.vmem %s5, %s43
    %s45 = sld [smem:[#allocation4]]
  $region17: #{contrastive_loss.1} parent=0 // pred_fallthru
    _
  // Predicated region
  $region18: #{contrastive_loss.1} parent=0 // pred_check
    _
  $region19: #{contrastive_loss.1} parent=0 // pred_check_branch
    %47 = sbr.rel (0) target = $region21
  $region20: #{contrastive_loss.1} parent=0 // pred_region
    %s48 = sld [smem:[#allocation3]]
    %p49 = scmp.lt.s32.totalorder %s48, 0
    %s50 = scalar_select %p49, %s48, 0
    %s51 = smul.addr %s50, 8
    %s52 = scalar_lea.vmem %s6, %s51
    %s53 = sld [smem:[#allocation3]]
  $region21: #{contrastive_loss.1} parent=0 // pred_fallthru
    _
  // Predicated region
  $region22: #{contrastive_loss.1} parent=0 // pred_check
    _
  $region23: #{contrastive_loss.1} parent=0 // pred_check_branch
    %55 = sbr.rel (0) target = $region25
  $region24: #{contrastive_loss.1} parent=0 // pred_region
    %s56 = sld [smem:[#allocation4]]
    %p57 = scmp.lt.s32.totalorder %s56, 0
    %s58 = scalar_select %p57, %s56, 0
    %s59 = scalar_lea.vmem %s7, %s58
    %s60 = sld [smem:[#allocation4]]
  $region25: #{contrastive_loss.1} parent=0 // pred_fallthru
    _
  %s61 = sld [smem:[#allocation3]]
  %p62 = scmp.lt.s32.totalorder %s61, 0
  %s63 = scalar_select %p62, %s61, 0
  %s64 = smul.addr %s63, 8
  %s65 = scalar_lea.vmem %s2, %s64
  %s66 = sld [smem:[#allocation4]]
  %p67 = scmp.lt.s32.totalorder %s66, 0
  %s68 = scalar_select %p67, %s66, 0
  %s69 = smul.addr %s68, 8
  %s70 = scalar_lea.vmem %s3, %s69
  %s71 = sld [smem:[#allocation3]]
  %p72 = scmp.lt.s32.totalorder %s71, 0
  %s73 = scalar_select %p72, %s71, 0
  %s74 = smul.addr %s73, 8
  %s75 = scalar_lea.vmem %s4, %s74
  %s76 = sld [smem:[#allocation4]]
  %p77 = scmp.lt.s32.totalorder %s76, 0
  %s78 = scalar_select %p77, %s76, 0
  %s79 = scalar_lea.vmem %s5, %s78
  %s80 = sld [smem:[#allocation3]]
  %p81 = scmp.lt.s32.totalorder %s80, 0
  %s82 = scalar_select %p81, %s80, 0
  %s83 = smul.addr %s82, 8
  %s84 = scalar_lea.vmem %s6, %s83
  %s85 = sld [smem:[#allocation4]]
  %p86 = scmp.lt.s32.totalorder %s85, 0
  %s87 = scalar_select %p86, %s85, 0
  %s88 = scalar_lea.vmem %s7, %s87
  %s89 = sld [smem:[#allocation3]]
  %p90 = scmp.lt.s32.totalorder %s89, 0
  %s91 = scalar_select %p90, %s89, 0
  %s92 = smul.addr %s91, 8
  %s93 = scalar_lea.vmem %s2, %s92
  %s94 = sld [smem:[#allocation3]]
  %s95 = sld [smem:[#allocation4]]
  %p96 = scmp.lt.s32.totalorder %s95, 0
  %s97 = scalar_select %p96, %s95, 0
  %s98 = smul.addr %s97, 8
  %s99 = scalar_lea.vmem %s3, %s98
  %s100 = sld [smem:[#allocation4]]
  %s101 = sld [smem:[#allocation3]]
  %p102 = scmp.lt.s32.totalorder %s101, 0
  %s103 = scalar_select %p102, %s101, 0
  %s104 = smul.addr %s103, 8
  %s105 = scalar_lea.vmem %s4, %s104
  %s106 = sld [smem:[#allocation3]]
  %s107 = sld [smem:[#allocation4]]
  %p108 = scmp.lt.s32.totalorder %s107, 0
  %s109 = scalar_select %p108, %s107, 0
  %s110 = scalar_lea.vmem %s5, %s109
  %s111 = sld [smem:[#allocation4]]
  %s112 = sld [smem:[#allocation3]]
  %p113 = scmp.lt.s32.totalorder %s112, 0
  %s114 = scalar_select %p113, %s112, 0
  %s115 = smul.addr %s114, 8
  %s116 = scalar_lea.vmem %s6, %s115
  %s117 = sld [smem:[#allocation3]]
  %s118 = sld [smem:[#allocation4]]
  %p119 = scmp.lt.s32.totalorder %s118, 0
  %s120 = scalar_select %p119, %s118, 0
  %s121 = scalar_lea.vmem %s7, %s120
  %s122 = sld [smem:[#allocation4]]
  %v123 = vld [vmem:[%s93] sm:$0xff]
  %v124 = vld [vmem:[%s99] sm:$0xff]
  %vm125 = vcmask 261120
  %v127 = vsel %vm125, %v123, 0
  %v130 = vsel %vm125, %v124, 0
  %132 = vmatprep.subr.mxu0 0.0
  %133 = vmatpush1.xpose.msra.mxu0 %v130
  %134 = vmatprep.subr.mxu0 0.0
  %135 = vmatpush1.xpose.msra.mxu0 0.0
  %136 = vmatprep.subr.mxu0 0.0
  %137 = vmatpush1.xpose.msra.mxu0 0.0
  %138 = vmatprep.subr.mxu0 0.0
  %139 = vmatpush1.xpose.msra.mxu0 0.0
  %140 = vmatprep.subr.mxu0 0.0
  %141 = vmatpush1.xpose.msra.mxu0 0.0
  %142 = vmatprep.subr.mxu0 0.0
  %143 = vmatpush1.xpose.msra.mxu0 0.0
  %144 = vmatprep.subr.mxu0 0.0
  %145 = vmatpush1.xpose.msra.mxu0 0.0
  %146 = vmatprep.subr.mxu0 0.0
  %147 = vmatpush1.xpose.msra.mxu0 0.0
  %148 = vmatprep.subr.mxu0 0.0
  %149 = vmatpush1.xpose.msra.mxu0 0.0
  %150 = vmatprep.subr.mxu0 0.0
  %151 = vmatpush1.xpose.msra.mxu0 0.0
  %152 = vmatprep.subr.mxu0 0.0
  %153 = vmatpush1.xpose.msra.mxu0 0.0
  %154 = vmatprep.subr.mxu0 0.0
  %155 = vmatpush1.xpose.msra.mxu0 0.0
  %156 = vmatprep.subr.mxu0 0.0
  %157 = vmatpush1.xpose.msra.mxu0 0.0
  %158 = vmatprep.subr.mxu0 0.0
  %159 = vmatpush1.xpose.msra.mxu0 0.0
  %160 = vmatprep.subr.mxu0 0.0
  %161 = vmatpush1.xpose.msra.mxu0 0.0
  %162 = vmatprep.subr.mxu0 0.0
  %163 = vmatpush1.xpose.msra.mxu0 0.0
  %164 = vmatprep.subr.mxu0 0.0
  %165 = vmatpush1.xpose.msra.mxu0 0.0
  %166 = vmatprep.subr.mxu0 0.0
  %167 = vmatpush1.xpose.msra.mxu0 0.0
  %168 = vmatprep.subr.mxu0 0.0
  %169 = vmatpush1.xpose.msra.mxu0 0.0
  %170 = vmatprep.subr.mxu0 0.0
  %171 = vmatpush1.xpose.msra.mxu0 0.0
  %172 = vmatprep.subr.mxu0 0.0
  %173 = vmatpush1.xpose.msra.mxu0 0.0
  %174 = vmatprep.subr.mxu0 0.0
  %175 = vmatpush1.xpose.msra.mxu0 0.0
  %176 = vmatprep.subr.mxu0 0.0
  %177 = vmatpush1.xpose.msra.mxu0 0.0
  %178 = vmatprep.subr.mxu0 0.0
  %179 = vmatpush1.xpose.msra.mxu0 0.0
  %180 = vmatprep.subr.mxu0 0.0
  %181 = vmatpush1.xpose.msra.mxu0 0.0
  %182 = vmatprep.subr.mxu0 0.0
  %183 = vmatpush1.xpose.msra.mxu0 0.0
  %184 = vmatprep.subr.mxu0 0.0
  %185 = vmatpush1.xpose.msra.mxu0 0.0
  %186 = vmatprep.subr.mxu0 0.0
  %187 = vmatpush1.xpose.msra.mxu0 0.0
  %188 = vmatprep.subr.mxu0 0.0
  %189 = vmatpush1.xpose.msra.mxu0 0.0
  %190 = vmatprep.subr.mxu0 0.0
  %191 = vmatpush1.xpose.msra.mxu0 0.0
  %192 = vmatprep.subr.mxu0 0.0
  %193 = vmatpush1.xpose.msra.mxu0 0.0
  %194 = vmatprep.subr.mxu0 0.0
  %195 = vmatpush1.xpose.msra.mxu0 0.0
  %196 = vmatprep.mubr.f32.mxu0 0.0
  %197 = vmatmul.mubr.f32.gmra.mrb[0].mxu0 %v127
  %v198 = vpop.f32.mrb[0].mxu0
  %v199 = vadd.f32 0.0, %v198
  %v200 = vpop.f32.mrb[0].mxu0
  %201 = vdwg.mxu0
  %v202 = vld [vmem:[%s105] sm:$0xff]
  %v203 = vld [vmem:[%s110] sm:$0x1]
  %205 = vset.pattern.permute.xlu0 0
  %206 = vperm.xlu0 %205, %v202
  %v207 = vpop.permute.xlu0 %206
  %v210 = vlaneseq
  %v211 = vshrl.u32 %v210, 7
  %v212 = vsub.s32 0, %v211
  %v213 = vrot.slane %v203, %v212
  %v215 = vadd.f32 %v207, %v213
  %v216 = vmul.f32 %v199, 2.0
  %v217 = vsub.f32 %v215, %v216
  %v218 = vmax.f32 %v217, 0.0
  %v219 = vrsqrt.pop %v218
  %v220 = vmul.f32 %v218, %v219
  %vm221 = vcmp.eq.f32.partialorder %v218, inf
  %v222 = vsel %vm221, %v218, %v220
  %vm223 = vcmp.eq.f32.partialorder %v218, 0.0
  %v224 = vand.u32 %v218, 2147483648
  %v225 = vsel %vm223, %v224, %v222
  %v226 = vadd.f32 %v225, 1e-08
  %v227 = vld [vmem:[%s116] sm:$0xff]
  %v228 = vld [vmem:[%s121] sm:$0x1]
  %229 = vset.pattern.permute.xlu0 0
  %230 = vperm.xlu0 %229, %v227
  %v231 = vpop.permute.xlu0 %230
  %v232 = vlaneseq
  %v233 = vshrl.u32 %v232, 7
  %v234 = vsub.s32 0, %v233
  %v235 = vrot.slane %v228, %v234
  %vm236 = vcmp.eq.s32.totalorder %v231, %v235
  %v237 = vsub.f32 0.2, %v226
  %v238 = vmax.f32 %v237, 0.0
  %v239 = vsel %vm236, %v226, %v238
  %v240 = vmul.f32 %v239, %v239
  %vm241 = vcmask 64512
  %v242 = vsel %vm241, %v240, 0.0
  %243 = vadd.xlane.f32.xlu0 %v242
  %v244 = vpop.xlane.xlu0 %243
  %s245 = sld [smem:[#allocation3]]
  %s246 = sld [smem:[#allocation4]]
  %p247 = scmp.eq.s32.totalorder %s245, %s246
  %s248 = scalar_select %p247, 1.0, 2.0
  %vm249 = vcmask 7168
  %v250 = vsel %vm249, %v244, 0.0
  %251 = vadd.xlane.f32.xlu0 %v250
  %v252 = vpop.xlane.xlu0 %251
  %v253 = vrot.slane %v252, 4
  %v254 = vadd.f32 %v252, %v253
  %v255 = vrot.slane %v254, 2
  %v256 = vadd.f32 %v254, %v255
  %v257 = vrot.slane %v256, 1
  %v258 = vadd.f32 %v256, %v257
  %s259 = vtos %v258
  %s260 = smul.f32 %s259, %s248
  %v261 = vstv %s260
  %262 = vst [vmem:[%s8] sm:$0xff] %v261
  // Predicated region
  $region26: #{contrastive_loss.1} parent=0 // pred_check
    _
  $region27: #{contrastive_loss.1} parent=0 // pred_check_branch
    %264 = sbr.rel (0) target = $region29
  $region28: #{contrastive_loss.1} parent=0 // pred_region
    _
  $region29: #{contrastive_loss.1} parent=0 // pred_fallthru
    _
  // Predicated region
  $region30: #{contrastive_loss.1} parent=0 // pred_check
    _
  $region31: #{contrastive_loss.1} parent=0 // pred_check_branch
    %266 = sbr.rel (0) target = $region33
  $region32: #{contrastive_loss.1} parent=0 // pred_region
    _
  $region33: #{contrastive_loss.1} parent=0 // pred_fallthru
    _

</llo_original>
